<compile_context>
chip_gen: v6e
topology: v6e:2x2x1
jax: 0.10.0
libtpu: 0.0.40
codegen_flags: <defaults>
</compile_context>

<pallas_src>
import functools
import math

import jax
import jax.numpy as jnp
from jax.experimental import pallas as pl
from jax.experimental.pallas import tpu as pltpu


def _round_up(a: int, b: int) -> int:
    return ((a + b - 1) // b) * b


def _vmem_budget_bytes() -> int:
    """VMEM budget with headroom, derived from the actual chip (v7x: 64 MiB/TC)."""
    try:
        cap = int(pltpu.get_tpu_info().vmem_capacity_bytes)
    except Exception:
        cap = 128 * 2**20
    return int(min(cap * 0.75, 100 * 2**20))


# ----------------------------------------------------------------------------- kernel
def ffn_kernel(x_ref, gamma_ref, beta_ref, w1_ref, b1_ref, w2_ref, b2_ref,
               o_ref, xn_ref, acc_ref, *, true_dim, eps):
    """Grid = (row_tiles, hidden_tiles).  x_ref: (tm, dim_p) row tile (native dtype)."""
    j = pl.program_id(1)

    @pl.when(j == 0)
    def _():
        # --- LayerNorm over the true (unpadded) feature width, two-pass variance ---
        x = x_ref[...].astype(jnp.float32)
        inv_d = jnp.float32(1.0 / true_dim)
        mean = jnp.sum(x, axis=-1, keepdims=True) * inv_d
        centered = x - mean
        if true_dim != x.shape[-1]:
            # Padded lanes hold zeros in x; mask them out of the centered values so
            # they contribute neither to the variance nor to xn.
            mask = jax.lax.broadcasted_iota(jnp.int32, x.shape, 1) < true_dim
            centered = jnp.where(mask, centered, 0.0)
        var = jnp.sum(centered * centered, axis=-1, keepdims=True) * inv_d
        xn = centered * jax.lax.rsqrt(var + eps)
        xn = xn * gamma_ref[...] + beta_ref[...]
        xn_ref[...] = xn.astype(xn_ref.dtype)          # cached for all hidden tiles
        acc_ref[...] = jnp.zeros_like(acc_ref)

    # --- Linear(dim -> hidden tile j): MXU, f32 accumulate ---
    h = jnp.dot(xn_ref[...], w1_ref[...], preferred_element_type=jnp.float32)
    h = h + b1_ref[...]

    # --- GELU (exact erf form, matches nn.GELU() default numerics) ---
    # TODO(synk): tanh-approx GELU would route the transcendental to the idle EUP
    # slot, but changes numerics vs nn.GELU(); only worth it if the VPU saturates.
    h = 0.5 * h * (1.0 + jax.lax.erf(h * jnp.float32(1.0 / math.sqrt(2.0))))

    # --- Linear(hidden tile j -> dim): accumulate over hidden tiles ---
    acc_ref[...] += jnp.dot(h.astype(w2_ref.dtype), w2_ref[...],
                            preferred_element_type=jnp.float32)

    @pl.when(j == pl.num_programs(1) - 1)
    def _():
        # Dropout(p=0.0) is the identity -> nothing to do.
        o_ref[...] = (acc_ref[...] + b2_ref[...]).astype(o_ref.dtype)


# ------------------------------------------------------------------- parameter prep
def prepare_ffn_params(gamma, beta, w1, b1, w2, b2, *,
                       matmul_dtype=jnp.bfloat16, th=512):
    """Cast + pad the weights ONCE (hoisted out of the per-forward-call path).

    Weights are [in, out].  Returns a dict consumed by `feed_forward_prepared`.
    """
    dim, hidden = w1.shape
    f32 = jnp.float32

    # lane-dense padded feature width
    dim_p = _round_up(dim, 128)

    # hidden tile: prefer multiples of 256 (v6e/v7x MXU width); pad hidden UP to a
    # multiple of th instead of shrinking th toward 128.
    hid_128 = _round_up(hidden, 128)
    if hid_128 <= 256:
        th_sel = hid_128
    else:
        th_sel = min(_round_up(th, 256), _round_up(hid_128, 256))
    hid_p = _round_up(hid_128, th_sel)

    return dict(
        dim=dim, hidden=hidden, dim_p=dim_p, hid_p=hid_p, th=th_sel,
        matmul_dtype=matmul_dtype,
        gamma=jnp.pad(gamma.astype(f32).reshape(1, dim), ((0, 0), (0, dim_p - dim))),
        beta=jnp.pad(beta.astype(f32).reshape(1, dim), ((0, 0), (0, dim_p - dim))),
        w1=jnp.pad(w1.astype(matmul_dtype), ((0, dim_p - dim), (0, hid_p - hidden))),
        b1=jnp.pad(b1.astype(f32).reshape(1, hidden), ((0, 0), (0, hid_p - hidden))),
        w2=jnp.pad(w2.astype(matmul_dtype), ((0, hid_p - hidden), (0, dim_p - dim))),
        b2=jnp.pad(b2.astype(f32).reshape(1, dim), ((0, 0), (0, dim_p - dim))),
    )


def _pick_row_tile(rows, dim_p, th, hid_p, x_bytes, mm_bytes, out_bytes, budget):
    """Largest row tile that fits the VMEM budget; prefer one that divides rows."""
    def est(tm):
        return (2 * tm * dim_p * x_bytes       # x blocks (double-buffered, native dtype)
                + 2 * dim_p * th * mm_bytes    # w1 blocks
                + 2 * th * dim_p * mm_bytes    # w2 blocks
                + 2 * tm * dim_p * out_bytes   # out blocks
                + tm * dim_p * mm_bytes        # xn scratch
                + tm * dim_p * 4               # f32 accumulator scratch
                + 4 * 2 * (dim_p + hid_p) * 4)  # biases / affine params

    cap = max(16, _round_up(rows, 16))
    base = [1024, 768, 512, 384, 256, 128, 64, 32, 16]
    cands = sorted({c for c in base if c <= cap} | {min(cap, 1024)}, reverse=True)

    fitting = [c for c in cands if est(c) <= budget] or [cands[-1]]
    # Prefer a tile that divides the row count (avoids row padding + output slice copy).
    for c in fitting:
        if rows % c == 0:
            return c, est(c)
    return fitting[0], est(fitting[0])


# ----------------------------------------------------------------------------- wrapper
def feed_forward_prepared(x, params, *, tm=None, eps=1e-5):
    """x: (B, S, dim) in its native dtype. Returns (B, S, dim) in x.dtype."""
    B, S, dim = x.shape
    assert dim == params["dim"]
    rows = B * S
    out_dtype = x.dtype

    dim_p, hid_p, th = params["dim_p"], params["hid_p"], params["th"]
    matmul_dtype = params["matmul_dtype"]
    mm_bytes = jnp.dtype(matmul_dtype).itemsize
    x_bytes = jnp.dtype(x.dtype).itemsize
    out_bytes = jnp.dtype(out_dtype).itemsize

    budget = _vmem_budget_bytes()
    if tm is None:
        tm, est = _pick_row_tile(rows, dim_p, th, hid_p,
                                 x_bytes, mm_bytes, out_bytes, budget)
    else:
        tm = max(16, min(_round_up(tm, 16), _round_up(rows, 16)))
        _, est = _pick_row_tile(rows, dim_p, th, hid_p,
                                x_bytes, mm_bytes, out_bytes, budget)
    rows_p = _round_up(rows, tm)
    grid = (rows_p // tm, hid_p // th)

    # x stays in its native dtype — only pad (no f32 upcast pass through HBM).
    x2d = x.reshape(rows, dim)
    if rows_p != rows or dim_p != dim:
        x2d = jnp.pad(x2d, ((0, rows_p - rows), (0, dim_p - dim)))

    vmem_limit = int(min(max(int(est * 1.25), 32 * 2**20), budget))

    cost = pl.CostEstimate(
        flops=2 * 2 * rows_p * dim_p * hid_p,              # two matmuls
        transcendentals=rows_p * hid_p,                    # erf in GELU
        bytes_accessed=int(
            rows_p * dim_p * x_bytes
            + grid[0] * (params["w1"].size + params["w2"].size) * mm_bytes  # re-streamed
            + (params["gamma"].size + params["beta"].size
               + params["b1"].size + params["b2"].size) * 4
            + rows_p * dim_p * out_bytes),
    )

    kernel = functools.partial(ffn_kernel, true_dim=dim, eps=eps)

    out2d = pl.pallas_call(
        kernel,
        out_shape=jax.ShapeDtypeStruct((rows_p, dim_p), out_dtype),
        grid_spec=pltpu.PrefetchScalarGridSpec(
            num_scalar_prefetch=0,
            grid=grid,
            in_specs=[
                pl.BlockSpec((tm, dim_p), lambda i, j: (i, 0)),   # x row tile
                pl.BlockSpec((1, dim_p), lambda i, j: (0, 0)),    # gamma
                pl.BlockSpec((1, dim_p), lambda i, j: (0, 0)),    # beta
                pl.BlockSpec((dim_p, th), lambda i, j: (0, j)),   # w1 hidden tile
                pl.BlockSpec((1, th), lambda i, j: (0, j)),       # b1 hidden tile
                pl.BlockSpec((th, dim_p), lambda i, j: (j, 0)),   # w2 hidden tile
                pl.BlockSpec((1, dim_p), lambda i, j: (0, 0)),    # b2
            ],
            out_specs=pl.BlockSpec((tm, dim_p), lambda i, j: (i, 0)),
            scratch_shapes=[
                pltpu.VMEM((tm, dim_p), matmul_dtype),   # cached LayerNorm output
                pltpu.VMEM((tm, dim_p), jnp.float32),    # f32 accumulator
            ],
        ),
        compiler_params=pltpu.CompilerParams(
            dimension_semantics=("parallel", "arbitrary"),
            vmem_limit_bytes=vmem_limit,
        ),
        cost_estimate=cost,
    )(x2d, params["gamma"], params["beta"], params["w1"], params["b1"],
      params["w2"], params["b2"])

    if rows_p == rows and dim_p == dim:
        return out2d.reshape(B, S, dim)
    return out2d[:rows, :dim].reshape(B, S, dim)


def feed_forward(x, gamma, beta, w1, b1, w2, b2, *,
                 tm=None, th=512, matmul_dtype=jnp.bfloat16, eps=1e-5):
    """Convenience wrapper (prepares params per call; prefer prepare_ffn_params once)."""
    params = prepare_ffn_params(gamma, beta, w1, b1, w2, b2,
                                matmul_dtype=matmul_dtype, th=th)
    return feed_forward_prepared(x, params, tm=tm, eps=eps)


# ----------------------------------------------------------------------------- test
if __name__ == "__main__":
    # Small shapes consistent with the module: FeedForward(dim=32, hidden_dim=128).
    B, S, dim, hidden = 2, 8, 32, 128

    key = jax.random.PRNGKey(0)
    kx, kw1, kb1, kw2, kb2 = jax.random.split(key, 5)

    x = jax.random.normal(kx, (B, S, dim), dtype=jnp.float32)

    # LayerNorm params: PyTorch default init (ones / zeros).
    gamma = jnp.ones((dim,), dtype=jnp.float32)
    beta = jnp.zeros((dim,), dtype=jnp.float32)

    # Linear params stored as [in, out] (transposed vs torch's [out, in]).
    bound1 = 1.0 / math.sqrt(dim)
    w1 = jax.random.uniform(kw1, (dim, hidden), jnp.float32, -bound1, bound1)
    b1 = jax.random.uniform(kb1, (hidden,), jnp.float32, -bound1, bound1)
    bound2 = 1.0 / math.sqrt(hidden)
    w2 = jax.random.uniform(kw2, (hidden, dim), jnp.float32, -bound2, bound2)
    b2 = jax.random.uniform(kb2, (dim,), jnp.float32, -bound2, bound2)

    # Reference in plain JAX (same math as the PyTorch module, f32).
    xf = x.astype(jnp.float32)
    mean = jnp.mean(xf, axis=-1, keepdims=True)
    var = jnp.mean((xf - mean) ** 2, axis=-1, keepdims=True)
    xn = (xf - mean) / jnp.sqrt(var + 1e-5) * gamma + beta
    h = xn @ w1 + b1
    h = 0.5 * h * (1.0 + jax.lax.erf(h / jnp.sqrt(2.0)))
    ref = h @ w2 + b2

    # 1) strict check: f32 MXU path must match the PyTorch-style reference tightly.
    p_f32 = prepare_ffn_params(gamma, beta, w1, b1, w2, b2, matmul_dtype=jnp.float32)
    out_f32 = jax.block_until_ready(feed_forward_prepared(x, p_f32))
    assert out_f32.shape == x.shape
    assert jnp.allclose(out_f32, ref, atol=1e-5, rtol=1e-5)

    # 2) default fast path: bf16 MXU operands, f32 accumulation (looser tolerance).
    #    Weight cast/pad is done ONCE here and reused (hoisted out of the call path).
    p_bf16 = prepare_ffn_params(gamma, beta, w1, b1, w2, b2, matmul_dtype=jnp.bfloat16)
    out_bf16 = jax.block_until_ready(feed_forward_prepared(x, p_bf16))
    assert out_bf16.shape == x.shape
    assert jnp.allclose(out_bf16, ref, atol=5e-2, rtol=5e-2)

    print("KERNEL_OK")
</pallas_src>

<mosaic_0001>
module attributes {stable_mosaic.version = 11 : i64} {
  func.func @ffn_kernel(%arg0: i32, %arg1: i32, %arg2: memref<16x128xf32, #tpu.memory_space<vmem>>, %arg3: memref<1x128xf32, #tpu.memory_space<vmem>>, %arg4: memref<1x128xf32, #tpu.memory_space<vmem>>, %arg5: memref<128x128xf32, #tpu.memory_space<vmem>>, %arg6: memref<1x128xf32, #tpu.memory_space<vmem>>, %arg7: memref<128x128xf32, #tpu.memory_space<vmem>>, %arg8: memref<1x128xf32, #tpu.memory_space<vmem>>, %arg9: memref<16x128xf32, #tpu.memory_space<vmem>>, %arg10: memref<16x128xf32, #tpu.memory_space<vmem>>, %arg11: memref<16x128xf32, #tpu.memory_space<vmem>>) attributes {dimension_semantics = [#tpu.dimension_semantics<parallel>, #tpu.dimension_semantics<arbitrary>], iteration_bounds = array<i64: 1, 1>, scalar_prefetch = 0 : i64, scratch_operands = 2 : i64, tpu.core_type = #tpu.core_type<tc>, window_params = [{transform_indices = @transform_0, window_bounds = array<i64: 16, 128>}, {pipeline_mode = #tpu.pipeline_mode<synchronous>, transform_indices = @transform_1, window_bounds = array<i64: 1, 128>}, {pipeline_mode = #tpu.pipeline_mode<synchronous>, transform_indices = @transform_2, window_bounds = array<i64: 1, 128>}, {transform_indices = @transform_3, window_bounds = array<i64: 128, 128>}, {transform_indices = @transform_4, window_bounds = array<i64: 1, 128>}, {transform_indices = @transform_5, window_bounds = array<i64: 128, 128>}, {pipeline_mode = #tpu.pipeline_mode<synchronous>, transform_indices = @transform_6, window_bounds = array<i64: 1, 128>}, {transform_indices = @transform_7, window_bounds = array<i64: 16, 128>}]} {
    %c0_i32 = arith.constant 0 : i32
    %0 = arith.cmpi eq, %arg1, %c0_i32 : i32
    %1 = arith.extui %0 : i1 to i32
    %c0_i32_0 = arith.constant 0 : i32
    %2 = arith.cmpi ne, %1, %c0_i32_0 : i32
    scf.if %2 {
      %c0_18 = arith.constant 0 : index
      %c0_19 = arith.constant 0 : index
      %25 = vector.load %arg2[%c0_18, %c0_19] : memref<16x128xf32, #tpu.memory_space<vmem>>, vector<16x128xf32>
      %cst_20 = arith.constant dense<0.000000e+00> : vector<16xf32>
      %26 = vector.multi_reduction <add>, %25, %cst_20 [1] : vector<16x128xf32> to vector<16xf32>
      %27 = vector.shape_cast %26 : vector<16xf32> to vector<16x1xf32>
      %cst_21 = arith.constant 3.125000e-02 : f32
      %28 = vector.broadcast %cst_21 : f32 to vector<16x1xf32>
      %29 = arith.mulf %27, %28 : vector<16x1xf32>
      %30 = vector.broadcast %29 : vector<16x1xf32> to vector<16x128xf32>
      %31 = arith.subf %25, %30 : vector<16x128xf32>
      %32 = tpu.iota {dimensions = array<i32: 1>} : vector<16x128xi32>
      %c32_i32 = arith.constant 32 : i32
      %33 = vector.broadcast %c32_i32 : i32 to vector<16x128xi32>
      %34 = arith.cmpi slt, %32, %33 : vector<16x128xi32>
      %cst_22 = arith.constant 0.000000e+00 : f32
      %35 = vector.broadcast %cst_22 : f32 to vector<16x128xf32>
      %36 = arith.select %34, %31, %35 : vector<16x128xi1>, vector<16x128xf32>
      %37 = arith.mulf %36, %36 : vector<16x128xf32>
      %cst_23 = arith.constant dense<0.000000e+00> : vector<16xf32>
      %38 = vector.multi_reduction <add>, %37, %cst_23 [1] : vector<16x128xf32> to vector<16xf32>
      %39 = vector.shape_cast %38 : vector<16xf32> to vector<16x1xf32>
      %cst_24 = arith.constant 3.125000e-02 : f32
      %40 = vector.broadcast %cst_24 : f32 to vector<16x1xf32>
      %41 = arith.mulf %39, %40 : vector<16x1xf32>
      %cst_25 = arith.constant 9.99999974E-6 : f32
      %42 = vector.broadcast %cst_25 : f32 to vector<16x1xf32>
      %43 = arith.addf %41, %42 : vector<16x1xf32>
      %44 = math.rsqrt %43 : vector<16x1xf32>
      %45 = vector.broadcast %44 : vector<16x1xf32> to vector<16x128xf32>
      %46 = arith.mulf %36, %45 : vector<16x128xf32>
      %c0_26 = arith.constant 0 : index
      %c0_27 = arith.constant 0 : index
      %47 = vector.load %arg3[%c0_26, %c0_27] : memref<1x128xf32, #tpu.memory_space<vmem>>, vector<1x128xf32>
      %48 = vector.broadcast %47 : vector<1x128xf32> to vector<16x128xf32>
      %49 = arith.mulf %46, %48 : vector<16x128xf32>
      %c0_28 = arith.constant 0 : index
      %c0_29 = arith.constant 0 : index
      %50 = vector.load %arg4[%c0_28, %c0_29] : memref<1x128xf32, #tpu.memory_space<vmem>>, vector<1x128xf32>
      %51 = vector.broadcast %50 : vector<1x128xf32> to vector<16x128xf32>
      %52 = arith.addf %49, %51 : vector<16x128xf32>
      %c0_30 = arith.constant 0 : index
      %c0_31 = arith.constant 0 : index
      %53 = vector.load %arg10[%c0_30, %c0_31] : memref<16x128xf32, #tpu.memory_space<vmem>>, vector<16x128xf32>
      tpu.vector_store %arg10[%c0_30, %c0_31], %52 {strides = array<i32>} : memref<16x128xf32, #tpu.memory_space<vmem>>, vector<16x128xf32>,
      %cst_32 = arith.constant 0.000000e+00 : f32
      %54 = vector.broadcast %cst_32 : f32 to vector<16x128xf32>
      %c0_33 = arith.constant 0 : index
      %c0_34 = arith.constant 0 : index
      %55 = vector.load %arg11[%c0_33, %c0_34] : memref<16x128xf32, #tpu.memory_space<vmem>>, vector<16x128xf32>
      tpu.vector_store %arg11[%c0_33, %c0_34], %54 {strides = array<i32>} : memref<16x128xf32, #tpu.memory_space<vmem>>, vector<16x128xf32>,
    } else {
    }
    %c0 = arith.constant 0 : index
    %c0_1 = arith.constant 0 : index
    %3 = vector.load %arg10[%c0, %c0_1] : memref<16x128xf32, #tpu.memory_space<vmem>>, vector<16x128xf32>
    %c0_2 = arith.constant 0 : index
    %c0_3 = arith.constant 0 : index
    %4 = vector.load %arg5[%c0_2, %c0_3] : memref<128x128xf32, #tpu.memory_space<vmem>>, vector<128x128xf32>
    %cst = arith.constant dense<0.000000e+00> : vector<16x128xf32>
    %5 = tpu.matmul %3, %4, %cst {dimension_numbers = #tpu.dot_dimension_numbers<[1], [0], [0], [1], [0, 0, 1, 1], [], []>} : vector<16x128xf32>, vector<128x128xf32>, vector<16x128xf32> -> vector<16x128xf32>
    %c0_4 = arith.constant 0 : index
    %c0_5 = arith.constant 0 : index
    %6 = vector.load %arg6[%c0_4, %c0_5] : memref<1x128xf32, #tpu.memory_space<vmem>>, vector<1x128xf32>
    %7 = vector.broadcast %6 : vector<1x128xf32> to vector<16x128xf32>
    %8 = arith.addf %5, %7 : vector<16x128xf32>
    %cst_6 = arith.constant 5.000000e-01 : f32
    %9 = vector.broadcast %cst_6 : f32 to vector<16x128xf32>
    %10 = arith.mulf %9, %8 : vector<16x128xf32>
    %cst_7 = arith.constant 0.707106769 : f32
    %11 = vector.broadcast %cst_7 : f32 to vector<16x128xf32>
    %12 = arith.mulf %8, %11 : vector<16x128xf32>
    %13 = math.erf %12 : vector<16x128xf32>
    %cst_8 = arith.constant 1.000000e+00 : f32
    %14 = vector.broadcast %cst_8 : f32 to vector<16x128xf32>
    %15 = arith.addf %14, %13 : vector<16x128xf32>
    %16 = arith.mulf %10, %15 : vector<16x128xf32>
    %c0_9 = arith.constant 0 : index
    %c0_10 = arith.constant 0 : index
    %17 = vector.load %arg11[%c0_9, %c0_10] : memref<16x128xf32, #tpu.memory_space<vmem>>, vector<16x128xf32>
    %c0_11 = arith.constant 0 : index
    %c0_12 = arith.constant 0 : index
    %18 = vector.load %arg7[%c0_11, %c0_12] : memref<128x128xf32, #tpu.memory_space<vmem>>, vector<128x128xf32>
    %cst_13 = arith.constant dense<0.000000e+00> : vector<16x128xf32>
    %19 = tpu.matmul %16, %18, %cst_13 {dimension_numbers = #tpu.dot_dimension_numbers<[1], [0], [0], [1], [0, 0, 1, 1], [], []>} : vector<16x128xf32>, vector<128x128xf32>, vector<16x128xf32> -> vector<16x128xf32>
    %20 = arith.addf %17, %19 : vector<16x128xf32>
    %c0_14 = arith.constant 0 : index
    %c0_15 = arith.constant 0 : index
    %21 = vector.load %arg11[%c0_14, %c0_15] : memref<16x128xf32, #tpu.memory_space<vmem>>, vector<16x128xf32>
    tpu.vector_store %arg11[%c0_14, %c0_15], %20 {strides = array<i32>} : memref<16x128xf32, #tpu.memory_space<vmem>>, vector<16x128xf32>,
    %c0_i32_16 = arith.constant 0 : i32
    %22 = arith.cmpi eq, %arg1, %c0_i32_16 : i32
    %23 = arith.extui %22 : i1 to i32
    %c0_i32_17 = arith.constant 0 : i32
    %24 = arith.cmpi ne, %23, %c0_i32_17 : i32
    scf.if %24 {
      %c0_18 = arith.constant 0 : index
      %c0_19 = arith.constant 0 : index
      %25 = vector.load %arg11[%c0_18, %c0_19] : memref<16x128xf32, #tpu.memory_space<vmem>>, vector<16x128xf32>
      %c0_20 = arith.constant 0 : index
      %c0_21 = arith.constant 0 : index
      %26 = vector.load %arg8[%c0_20, %c0_21] : memref<1x128xf32, #tpu.memory_space<vmem>>, vector<1x128xf32>
      %27 = vector.broadcast %26 : vector<1x128xf32> to vector<16x128xf32>
      %28 = arith.addf %25, %27 : vector<16x128xf32>
      %c0_22 = arith.constant 0 : index
      %c0_23 = arith.constant 0 : index
      %29 = vector.load %arg9[%c0_22, %c0_23] : memref<16x128xf32, #tpu.memory_space<vmem>>, vector<16x128xf32>
      tpu.vector_store %arg9[%c0_22, %c0_23], %28 {strides = array<i32>} : memref<16x128xf32, #tpu.memory_space<vmem>>, vector<16x128xf32>,
    } else {
    }
    return
  }
  func.func @transform_0(%arg0: i32, %arg1: i32) -> (i32, i32) {
    %c0_i32 = arith.constant 0 : i32
    %c0_i32_0 = arith.constant 0 : i32
    return %arg0, %c0_i32 : i32, i32
  }
  func.func @transform_1(%arg0: i32, %arg1: i32) -> (i32, i32) {
    %c0_i32 = arith.constant 0 : i32
    %c0_i32_0 = arith.constant 0 : i32
    %c0_i32_1 = arith.constant 0 : i32
    return %c0_i32, %c0_i32_0 : i32, i32
  }
  func.func @transform_2(%arg0: i32, %arg1: i32) -> (i32, i32) {
    %c0_i32 = arith.constant 0 : i32
    %c0_i32_0 = arith.constant 0 : i32
    %c0_i32_1 = arith.constant 0 : i32
    return %c0_i32, %c0_i32_0 : i32, i32
  }
  func.func @transform_3(%arg0: i32, %arg1: i32) -> (i32, i32) {
    %c0_i32 = arith.constant 0 : i32
    %c0_i32_0 = arith.constant 0 : i32
    return %c0_i32, %arg1 : i32, i32
  }
  func.func @transform_4(%arg0: i32, %arg1: i32) -> (i32, i32) {
    %c0_i32 = arith.constant 0 : i32
    %c0_i32_0 = arith.constant 0 : i32
    return %c0_i32, %arg1 : i32, i32
  }
  func.func @transform_5(%arg0: i32, %arg1: i32) -> (i32, i32) {
    %c0_i32 = arith.constant 0 : i32
    %c0_i32_0 = arith.constant 0 : i32
    return %arg1, %c0_i32 : i32, i32
  }
  func.func @transform_6(%arg0: i32, %arg1: i32) -> (i32, i32) {
    %c0_i32 = arith.constant 0 : i32
    %c0_i32_0 = arith.constant 0 : i32
    %c0_i32_1 = arith.constant 0 : i32
    return %c0_i32, %c0_i32_0 : i32, i32
  }
  func.func @transform_7(%arg0: i32, %arg1: i32) -> (i32, i32) {
    %c0_i32 = arith.constant 0 : i32
    %c0_i32_0 = arith.constant 0 : i32
    return %arg0, %c0_i32 : i32, i32
  }
}

</mosaic_0001>

<llo_original>
// kernel: tpu_custom_call.1
$region0: #{tpu_custom_call.1}
  #allocation0 [shape = 'u32[]', space=smem, size = 0x4, offset = 0x4, fixed_abs, tag = 'smem constant byte address 0x4 - core index']
  #allocation1 [shape = 'u32[144,128]{1,0:T(1,128)}', space=vmem, size = 0x12000, scoped, tag = 'internal scratch']
  #allocation2 [shape = 'f32[16,128]{1,0:T(8,128)}', space=vmem, size = 0x2000, scoped, tag = 'scratch operand']
  #allocation3 [shape = 'f32[16,128]{1,0:T(8,128)}', space=vmem, size = 0x2000, scoped, tag = 'scratch operand']
  %s0 = inlined_call_operand.hbm [shape: f32[16,128], index: 0, kind: input, shape index: {}]
  %s1 = inlined_call_operand.vmem [shape: f32[1,128], index: 1, kind: input, shape index: {}]
  %s2 = inlined_call_operand.vmem [shape: f32[1,128], index: 2, kind: input, shape index: {}]
  %s3 = inlined_call_operand.hbm [shape: f32[128,128], index: 3, kind: input, shape index: {}]
  %s4 = inlined_call_operand.vmem [shape: f32[1,128], index: 4, kind: input, shape index: {}]
  %s5 = inlined_call_operand.hbm [shape: f32[128,128], index: 5, kind: input, shape index: {}]
  %s6 = inlined_call_operand.vmem [shape: f32[1,128], index: 6, kind: input, shape index: {}]
  %s7 = inlined_call_operand.hbm [shape: f32[16,128], index: 7, kind: output, shape index: {}]
  %s8 = sld [smem:[#allocation0]]
  $region58: #{tpu_custom_call.1} parent=0
    _
  %s10 = ssub.s32 1, %s8
  %s11 = scalar_select 0, %s10, %s8
  $region1: #{tpu_custom_call.1} parent=0
    #allocation4 [shape = 'u8[8192]{0}', space=vmem, size = 0x2000, scoped, tag = 'input window, operand 0, single buffered']
    #allocation5 [shape = 's32[1]{0}', space=sflag, size = 0x4, scoped, tag = 'scoped memory for tpu_custom_call.1']
    #allocation6 [shape = 's32[1]{0}', space=sflag, size = 0x4, scoped, tag = 'scoped memory for tpu_custom_call.1']
    #allocation7 [shape = 'u8[65536]{0}', space=vmem, size = 0x10000, scoped, tag = 'input window, operand 3, single buffered']
    #allocation8 [shape = 's32[1]{0}', space=sflag, size = 0x4, scoped, tag = 'scoped memory for tpu_custom_call.1']
    #allocation9 [shape = 'u8[65536]{0}', space=vmem, size = 0x10000, scoped, tag = 'input window, operand 5, single buffered']
    #allocation10 [shape = 'u8[8192]{0}', space=vmem, size = 0x2000, scoped, tag = 'output window, operand 0, single buffered']
    %12 = vsyncpa [#allocation5], 0
    %13 = vsyncpa [#allocation8], 0
    %14 = vsyncpa [#allocation6], 0
    // Predicated region
    $region2: #{tpu_custom_call.1} parent=1 // pred_check
      _
    $region3: #{tpu_custom_call.1} parent=1 // pred_check_branch
      %16 = sbr.rel (0) target = $region5
    $region4: #{tpu_custom_call.1} parent=1 // pred_region
      %s18 = ssub.s32 256, 256
      %19 = vsyncadd [#allocation5], %s18
      %s20 = sshll.u32 [#allocation4], 4
      %s21 = int_to_ptr.vmem [resolvable:$true] %s20
      %26 = dma.hbm_to_vmem [thread:$0]  %s0, 256, %s21, [#allocation5], 128, 128, 8
    $region5: #{tpu_custom_call.1} parent=1 // pred_fallthru
      _
    // Predicated region
    $region6: #{tpu_custom_call.1} parent=1 // pred_check
      _
    $region7: #{tpu_custom_call.1} parent=1 // pred_check_branch
      %28 = sbr.rel (0) target = $region9
    $region8: #{tpu_custom_call.1} parent=1 // pred_region
      _
    $region9: #{tpu_custom_call.1} parent=1 // pred_fallthru
      _
    // Predicated region
    $region10: #{tpu_custom_call.1} parent=1 // pred_check
      _
    $region11: #{tpu_custom_call.1} parent=1 // pred_check_branch
      %30 = sbr.rel (0) target = $region13
    $region12: #{tpu_custom_call.1} parent=1 // pred_region
      _
    $region13: #{tpu_custom_call.1} parent=1 // pred_fallthru
      _
    // Predicated region
    $region14: #{tpu_custom_call.1} parent=1 // pred_check
      _
    $region15: #{tpu_custom_call.1} parent=1 // pred_check_branch
      %32 = sbr.rel (0) target = $region17
    $region16: #{tpu_custom_call.1} parent=1 // pred_region
      %s34 = ssub.s32 2048, 2048
      %35 = vsyncadd [#allocation8], %s34
      %s36 = sshll.u32 [#allocation7], 4
      %s37 = int_to_ptr.vmem [resolvable:$true] %s36
      %42 = dma.hbm_to_vmem [thread:$0]  %s3, 2048, %s37, [#allocation8], 128, 128, 8
    $region17: #{tpu_custom_call.1} parent=1 // pred_fallthru
      _
    // Predicated region
    $region18: #{tpu_custom_call.1} parent=1 // pred_check
      _
    $region19: #{tpu_custom_call.1} parent=1 // pred_check_branch
      %44 = sbr.rel (0) target = $region21
    $region20: #{tpu_custom_call.1} parent=1 // pred_region
      _
    $region21: #{tpu_custom_call.1} parent=1 // pred_fallthru
      _
    // Predicated region
    $region22: #{tpu_custom_call.1} parent=1 // pred_check
      _
    $region23: #{tpu_custom_call.1} parent=1 // pred_check_branch
      %46 = sbr.rel (0) target = $region25
    $region24: #{tpu_custom_call.1} parent=1 // pred_region
      %s48 = ssub.s32 2048, 2048
      %49 = vsyncadd [#allocation8], %s48
      %s50 = sshll.u32 [#allocation9], 4
      %s51 = int_to_ptr.vmem [resolvable:$true] %s50
      %56 = dma.hbm_to_vmem [thread:$0]  %s5, 2048, %s51, [#allocation8], 128, 128, 8
    $region25: #{tpu_custom_call.1} parent=1 // pred_fallthru
      _
    // Predicated region
    $region26: #{tpu_custom_call.1} parent=1 // pred_check
      _
    $region27: #{tpu_custom_call.1} parent=1 // pred_check_branch
      %58 = sbr.rel (0) target = $region29
    $region28: #{tpu_custom_call.1} parent=1 // pred_region
      _
    $region29: #{tpu_custom_call.1} parent=1 // pred_fallthru
      _
    // Predicated region
    $region30: #{tpu_custom_call.1} parent=1 // pred_check
      _
    $region31: #{tpu_custom_call.1} parent=1 // pred_check_branch
      %60 = sbr.rel (0) target = $region33
    $region32: #{tpu_custom_call.1} parent=1 // pred_region
      %61 = dma.done [#allocation5], 256
    $region33: #{tpu_custom_call.1} parent=1 // pred_fallthru
      _
    // Predicated region
    $region34: #{tpu_custom_call.1} parent=1 // pred_check
      _
    $region35: #{tpu_custom_call.1} parent=1 // pred_check_branch
      %63 = sbr.rel (0) target = $region37
    $region36: #{tpu_custom_call.1} parent=1 // pred_region
      %64 = dma.done [#allocation8], 2048
    $region37: #{tpu_custom_call.1} parent=1 // pred_fallthru
      _
    // Predicated region
    $region38: #{tpu_custom_call.1} parent=1 // pred_check
      _
    $region39: #{tpu_custom_call.1} parent=1 // pred_check_branch
      %66 = sbr.rel (0) target = $region41
    $region40: #{tpu_custom_call.1} parent=1 // pred_region
      %67 = dma.done [#allocation8], 2048
    $region41: #{tpu_custom_call.1} parent=1 // pred_fallthru
      _
    %p68 = scmp.eq.s32.totalorder 0, 0
    // Predicated region
    $region42: #{tpu_custom_call.1} parent=1 // pred_check
      %p69 = pneg %p68
    $region43: #{tpu_custom_call.1} parent=1 // pred_check_branch
      %71 = sbr.rel (%p69) target = $region45
    $region44: #{tpu_custom_call.1} parent=1 // pred_region
      %v72 = vld [vmem:[#allocation4] sm:$0xff]
      %v73 = vld [vmem:[#allocation4 + $0x8] sm:$0xff]
      %74 = vadd.xlane.f32.xlu0 %v72
      %v75 = vpop.xlane.xlu0 %74
      %76 = vadd.xlane.f32.xlu0 %v73
      %v77 = vpop.xlane.xlu0 %76
      %v78 = vmul.f32 %v75, 0.03125
      %v79 = vmul.f32 %v77, 0.03125
      %v80 = vsub.f32 %v72, %v78
      %v81 = vsub.f32 %v73, %v79
      %v82 = vlaneseq
      %v83 = vand.u32 %v82, 127
      %vm84 = vcmp.lt.s32.totalorder %v83, 32
      %v85 = vsel %vm84, %v80, 0.0
      %v86 = vsel %vm84, %v81, 0.0
      %v87 = vmul.f32 %v85, %v85
      %v88 = vmul.f32 %v86, %v86
      %89 = vadd.xlane.f32.xlu0 %v87
      %v90 = vpop.xlane.xlu0 %89
      %91 = vadd.xlane.f32.xlu0 %v88
      %v92 = vpop.xlane.xlu0 %91
      %v93 = vmul.f32 %v90, 0.03125
      %v94 = vmul.f32 %v92, 0.03125
      %v95 = vadd.f32 %v93, 1e-05
      %v96 = vadd.f32 %v94, 1e-05
      %v97 = vrsqrt.pop %v95
      %v98 = vrsqrt.pop %v96
      %v99 = vmul.f32 %v85, %v97
      %v100 = vmul.f32 %v86, %v98
      %v101 = vld [vmem:[%s1] sm:$0x1]
      %v103 = vlaneseq
      %v104 = vshrl.u32 %v103, 7
      %v105 = vsub.s32 0, %v104
      %v106 = vrot.slane %v101, %v105
      %v108 = vmul.f32 %v99, %v106
      %v109 = vmul.f32 %v100, %v106
      %v110 = vld [vmem:[%s2] sm:$0x1]
      %v112 = vlaneseq
      %v113 = vshrl.u32 %v112, 7
      %v114 = vsub.s32 0, %v113
      %v115 = vrot.slane %v110, %v114
      %v117 = vadd.f32 %v108, %v115
      %v118 = vadd.f32 %v109, %v115
      %119 = vst [vmem:[#allocation2] sm:$0xff] %v117
      %120 = vst [vmem:[#allocation2 + $0x8] sm:$0xff] %v118
      %121 = vst [vmem:[#allocation3] sm:$0xff] 0.0
      %122 = vst [vmem:[#allocation3 + $0x8] sm:$0xff] 0.0
    $region45: #{tpu_custom_call.1} parent=1 // pred_fallthru
      _
    %v123 = vld [vmem:[#allocation2] sm:$0xff]
    %v124 = vld [vmem:[#allocation2 + $0x8] sm:$0xff]
    %v125 = vld [vmem:[#allocation7] sm:$0xff]
    %v126 = vld [vmem:[#allocation7 + $0x8] sm:$0xff]
    %v127 = vld [vmem:[#allocation7 + $0x10] sm:$0xff]
    %v128 = vld [vmem:[#allocation7 + $0x18] sm:$0xff]
    %v129 = vld [vmem:[#allocation7 + $0x20] sm:$0xff]
    %v130 = vld [vmem:[#allocation7 + $0x28] sm:$0xff]
    %v131 = vld [vmem:[#allocation7 + $0x30] sm:$0xff]
    %v132 = vld [vmem:[#allocation7 + $0x38] sm:$0xff]
    %v133 = vld [vmem:[#allocation7 + $0x40] sm:$0xff]
    %v134 = vld [vmem:[#allocation7 + $0x48] sm:$0xff]
    %v135 = vld [vmem:[#allocation7 + $0x50] sm:$0xff]
    %v136 = vld [vmem:[#allocation7 + $0x58] sm:$0xff]
    %v137 = vld [vmem:[#allocation7 + $0x60] sm:$0xff]
    %v138 = vld [vmem:[#allocation7 + $0x68] sm:$0xff]
    %v139 = vld [vmem:[#allocation7 + $0x70] sm:$0xff]
    %v140 = vld [vmem:[#allocation7 + $0x78] sm:$0xff]
    %v141 = vld [vmem:[%s4] sm:$0x1]
    %v143 = vlaneseq
    %v144 = vshrl.u32 %v143, 7
    %v145 = vsub.s32 0, %v144
    %v146 = vrot.slane %v141, %v145
    %148 = vmatprep.subr.mxu0 0.0
    %149 = vmatpush1.msra.mxu0 %v140
    %150 = vmatprep.subr.mxu0 0.0
    %151 = vmatpush1.msra.mxu0 %v139
    %152 = vmatprep.subr.mxu0 0.0
    %153 = vmatpush1.msra.mxu0 %v138
    %154 = vmatprep.subr.mxu0 0.0
    %155 = vmatpush1.msra.mxu0 %v137
    %156 = vmatprep.subr.mxu0 0.0
    %157 = vmatpush1.msra.mxu0 %v136
    %158 = vmatprep.subr.mxu0 0.0
    %159 = vmatpush1.msra.mxu0 %v135
    %160 = vmatprep.subr.mxu0 0.0
    %161 = vmatpush1.msra.mxu0 %v134
    %162 = vmatprep.subr.mxu0 0.0
    %163 = vmatpush1.msra.mxu0 %v133
    %164 = vmatprep.subr.mxu0 0.0
    %165 = vmatpush1.msra.mxu0 %v132
    %166 = vmatprep.subr.mxu0 0.0
    %167 = vmatpush1.msra.mxu0 %v131
    %168 = vmatprep.subr.mxu0 0.0
    %169 = vmatpush1.msra.mxu0 %v130
    %170 = vmatprep.subr.mxu0 0.0
    %171 = vmatpush1.msra.mxu0 %v129
    %172 = vmatprep.subr.mxu0 0.0
    %173 = vmatpush1.msra.mxu0 %v128
    %174 = vmatprep.subr.mxu0 0.0
    %175 = vmatpush1.msra.mxu0 %v127
    %176 = vmatprep.subr.mxu0 0.0
    %177 = vmatpush1.msra.mxu0 %v126
    %178 = vmatprep.subr.mxu0 0.0
    %179 = vmatpush1.msra.mxu0 %v125
    %180 = vmatprep.subr.mxu0 0.0
    %181 = vmatpush2.msra.mxu0 0.0
    %182 = vmatprep.subr.mxu0 0.0
    %183 = vmatpush2.msra.mxu0 0.0
    %184 = vmatprep.subr.mxu0 0.0
    %185 = vmatpush2.msra.mxu0 0.0
    %186 = vmatprep.subr.mxu0 0.0
    %187 = vmatpush2.msra.mxu0 0.0
    %188 = vmatprep.subr.mxu0 0.0
    %189 = vmatpush2.msra.mxu0 0.0
    %190 = vmatprep.subr.mxu0 0.0
    %191 = vmatpush2.msra.mxu0 0.0
    %192 = vmatprep.subr.mxu0 0.0
    %193 = vmatpush2.msra.mxu0 0.0
    %194 = vmatprep.subr.mxu0 0.0
    %195 = vmatpush2.msra.mxu0 0.0
    %196 = vmatprep.subr.mxu0 0.0
    %197 = vmatpush2.msra.mxu0 0.0
    %198 = vmatprep.subr.mxu0 0.0
    %199 = vmatpush2.msra.mxu0 0.0
    %200 = vmatprep.subr.mxu0 0.0
    %201 = vmatpush2.msra.mxu0 0.0
    %202 = vmatprep.subr.mxu0 0.0
    %203 = vmatpush2.msra.mxu0 0.0
    %204 = vmatprep.subr.mxu0 0.0
    %205 = vmatpush2.msra.mxu0 0.0
    %206 = vmatprep.subr.mxu0 0.0
    %207 = vmatpush2.msra.mxu0 0.0
    %208 = vmatprep.subr.mxu0 0.0
    %209 = vmatpush2.msra.mxu0 0.0
    %210 = vmatprep.subr.mxu0 0.0
    %211 = vmatpush2.msra.mxu0 0.0
    %212 = vmatprep.mubr.f32.mxu0 0.0
    %213 = vmatmul.mubr.f32.gmra.mxu0 %v123
    %v214 = vpop.f32.mrf.mxu0
    %v215 = vadd.f32 %v146, %v214
    %v216 = vpop.f32.mrf.mxu0
    %217 = vmatprep.mubr.f32.mxu0 0.0
    %218 = vmatmul.mubr.f32.gmra.mxu0 %v124
    %v219 = vpop.f32.mrf.mxu0
    %v220 = vadd.f32 %v146, %v219
    %v221 = vpop.f32.mrf.mxu0
    %222 = vdwg.mxu0
    %v223 = vmul.f32 %v215, 0.5
    %v224 = vmul.f32 %v220, 0.5
    %v225 = vmul.f32 %v215, 0.70710677
    %v226 = vmul.f32 %v220, 0.70710677
    %v227 = verf.f32.pop %v225
    %v228 = verf.f32.pop %v226
    %v229 = vadd.f32 %v227, 1.0
    %v230 = vadd.f32 %v228, 1.0
    %v231 = vmul.f32 %v223, %v229
    %v232 = vmul.f32 %v224, %v230
    %v233 = vld [vmem:[#allocation3] sm:$0xff]
    %v234 = vld [vmem:[#allocation3 + $0x8] sm:$0xff]
    %v235 = vld [vmem:[#allocation9] sm:$0xff]
    %v236 = vld [vmem:[#allocation9 + $0x8] sm:$0xff]
    %v237 = vld [vmem:[#allocation9 + $0x10] sm:$0xff]
    %v238 = vld [vmem:[#allocation9 + $0x18] sm:$0xff]
    %v239 = vld [vmem:[#allocation9 + $0x20] sm:$0xff]
    %v240 = vld [vmem:[#allocation9 + $0x28] sm:$0xff]
    %v241 = vld [vmem:[#allocation9 + $0x30] sm:$0xff]
    %v242 = vld [vmem:[#allocation9 + $0x38] sm:$0xff]
    %v243 = vld [vmem:[#allocation9 + $0x40] sm:$0xff]
    %v244 = vld [vmem:[#allocation9 + $0x48] sm:$0xff]
    %v245 = vld [vmem:[#allocation9 + $0x50] sm:$0xff]
    %v246 = vld [vmem:[#allocation9 + $0x58] sm:$0xff]
    %v247 = vld [vmem:[#allocation9 + $0x60] sm:$0xff]
    %v248 = vld [vmem:[#allocation9 + $0x68] sm:$0xff]
    %v249 = vld [vmem:[#allocation9 + $0x70] sm:$0xff]
    %v250 = vld [vmem:[#allocation9 + $0x78] sm:$0xff]
    %251 = vmatprep.subr.mxu0 0.0
    %252 = vmatpush1.msra.mxu0 %v250
    %253 = vmatprep.subr.mxu0 0.0
    %254 = vmatpush1.msra.mxu0 %v249
    %255 = vmatprep.subr.mxu0 0.0
    %256 = vmatpush1.msra.mxu0 %v248
    %257 = vmatprep.subr.mxu0 0.0
    %258 = vmatpush1.msra.mxu0 %v247
    %259 = vmatprep.subr.mxu0 0.0
    %260 = vmatpush1.msra.mxu0 %v246
    %261 = vmatprep.subr.mxu0 0.0
    %262 = vmatpush1.msra.mxu0 %v245
    %263 = vmatprep.subr.mxu0 0.0
    %264 = vmatpush1.msra.mxu0 %v244
    %265 = vmatprep.subr.mxu0 0.0
    %266 = vmatpush1.msra.mxu0 %v243
    %267 = vmatprep.subr.mxu0 0.0
    %268 = vmatpush1.msra.mxu0 %v242
    %269 = vmatprep.subr.mxu0 0.0
    %270 = vmatpush1.msra.mxu0 %v241
    %271 = vmatprep.subr.mxu0 0.0
    %272 = vmatpush1.msra.mxu0 %v240
    %273 = vmatprep.subr.mxu0 0.0
    %274 = vmatpush1.msra.mxu0 %v239
    %275 = vmatprep.subr.mxu0 0.0
    %276 = vmatpush1.msra.mxu0 %v238
    %277 = vmatprep.subr.mxu0 0.0
    %278 = vmatpush1.msra.mxu0 %v237
    %279 = vmatprep.subr.mxu0 0.0
    %280 = vmatpush1.msra.mxu0 %v236
    %281 = vmatprep.subr.mxu0 0.0
    %282 = vmatpush1.msra.mxu0 %v235
    %283 = vmatprep.subr.mxu0 0.0
    %284 = vmatpush2.msra.mxu0 0.0
    %285 = vmatprep.subr.mxu0 0.0
    %286 = vmatpush2.msra.mxu0 0.0
    %287 = vmatprep.subr.mxu0 0.0
    %288 = vmatpush2.msra.mxu0 0.0
    %289 = vmatprep.subr.mxu0 0.0
    %290 = vmatpush2.msra.mxu0 0.0
    %291 = vmatprep.subr.mxu0 0.0
    %292 = vmatpush2.msra.mxu0 0.0
    %293 = vmatprep.subr.mxu0 0.0
    %294 = vmatpush2.msra.mxu0 0.0
    %295 = vmatprep.subr.mxu0 0.0
    %296 = vmatpush2.msra.mxu0 0.0
    %297 = vmatprep.subr.mxu0 0.0
    %298 = vmatpush2.msra.mxu0 0.0
    %299 = vmatprep.subr.mxu0 0.0
    %300 = vmatpush2.msra.mxu0 0.0
    %301 = vmatprep.subr.mxu0 0.0
    %302 = vmatpush2.msra.mxu0 0.0
    %303 = vmatprep.subr.mxu0 0.0
    %304 = vmatpush2.msra.mxu0 0.0
    %305 = vmatprep.subr.mxu0 0.0
    %306 = vmatpush2.msra.mxu0 0.0
    %307 = vmatprep.subr.mxu0 0.0
    %308 = vmatpush2.msra.mxu0 0.0
    %309 = vmatprep.subr.mxu0 0.0
    %310 = vmatpush2.msra.mxu0 0.0
    %311 = vmatprep.subr.mxu0 0.0
    %312 = vmatpush2.msra.mxu0 0.0
    %313 = vmatprep.subr.mxu0 0.0
    %314 = vmatpush2.msra.mxu0 0.0
    %315 = vmatprep.mubr.f32.mxu0 0.0
    %316 = vmatmul.mubr.f32.gmra.mxu0 %v231
    %v317 = vpop.f32.mrf.mxu0
    %v318 = vadd.f32 0.0, %v317
    %v319 = vpop.f32.mrf.mxu0
    %320 = vmatprep.mubr.f32.mxu0 0.0
    %321 = vmatmul.mubr.f32.gmra.mxu0 %v232
    %v322 = vpop.f32.mrf.mxu0
    %v323 = vadd.f32 0.0, %v322
    %v324 = vpop.f32.mrf.mxu0
    %325 = vdwg.mxu0
    %v326 = vadd.f32 %v233, %v318
    %v327 = vadd.f32 %v234, %v323
    %328 = vst [vmem:[#allocation3] sm:$0xff] %v326
    %329 = vst [vmem:[#allocation3 + $0x8] sm:$0xff] %v327
    // Predicated region
    $region46: #{tpu_custom_call.1} parent=1 // pred_check
      %p330 = pneg %p68
    $region47: #{tpu_custom_call.1} parent=1 // pred_check_branch
      %332 = sbr.rel (%p330) target = $region49
    $region48: #{tpu_custom_call.1} parent=1 // pred_region
      %v333 = vld [vmem:[#allocation3] sm:$0xff]
      %v334 = vld [vmem:[#allocation3 + $0x8] sm:$0xff]
      %v335 = vld [vmem:[%s6] sm:$0x1]
      %v337 = vlaneseq
      %v338 = vshrl.u32 %v337, 7
      %v339 = vsub.s32 0, %v338
      %v340 = vrot.slane %v335, %v339
      %v342 = vadd.f32 %v333, %v340
      %v343 = vadd.f32 %v334, %v340
      %344 = vst [vmem:[#allocation10] sm:$0xff] %v342
      %345 = vst [vmem:[#allocation10 + $0x8] sm:$0xff] %v343
    $region49: #{tpu_custom_call.1} parent=1 // pred_fallthru
      _
    // Predicated region
    $region50: #{tpu_custom_call.1} parent=1 // pred_check
      _
    $region51: #{tpu_custom_call.1} parent=1 // pred_check_branch
      %347 = sbr.rel (0) target = $region53
    $region52: #{tpu_custom_call.1} parent=1 // pred_region
      %s349 = ssub.s32 256, 256
      %350 = vsyncadd [#allocation6], %s349
      %s351 = sshll.u32 [#allocation10], 4
      %s352 = int_to_ptr.vmem [resolvable:$true] %s351
      %357 = dma.vmem_to_hbm [thread:$0]  %s352, 256, %s7, [#allocation6], 128, 128, 8
    $region53: #{tpu_custom_call.1} parent=1 // pred_fallthru
      _
    // Predicated region
    $region54: #{tpu_custom_call.1} parent=1 // pred_check
      _
    $region55: #{tpu_custom_call.1} parent=1 // pred_check_branch
      %359 = sbr.rel (0) target = $region57
    $region56: #{tpu_custom_call.1} parent=1 // pred_region
      %360 = dma.done [#allocation6], 256
    $region57: #{tpu_custom_call.1} parent=1 // pred_fallthru
      _
    %361 = vsyncpa [#allocation5], 1
    %362 = vsyncpa [#allocation8], 1
    %363 = vsyncpa [#allocation6], 1

</llo_original>
